<compile_context>
chip_gen: v7x
topology: tpu7x:2x2x1
jax: 0.10.0
libtpu: 0.0.40
codegen_flags: <defaults>
</compile_context>

<pallas_src>
import jax
import jax.numpy as jnp
from jax.experimental import pallas as pl
from jax.experimental.pallas import tpu as pltpu

_TEMP = 0.01
_PAD_NEG = -1e9   # padded sim entries: sigmoid((pad - sim_i)/temp) underflows to ~0

# Slab row layout (per sample, shape (8, Np)):
#   row 0: positive mask (0/1), padded with 0
#   row 1: ndcg scalar, broadcast across lanes
#   row 2: neg_ndcg scalar, broadcast across lanes
#   row 3: similarities, padded with _PAD_NEG
#   rows 4..7: zero (sublane padding so the block is (8, 128k)-aligned)


# ----------------------------------------------------------------------------
# Pallas kernel: one retrieval set (padded to Np lanes) per grid step
# ----------------------------------------------------------------------------
def _erfa_kernel(slab_ref, sim_col_ref, out_ref):
    #   slab_ref    : VMEM (1, 8, Np)  -> packed per-sample metadata (see layout above)
    #   sim_col_ref : VMEM (1, Np, 1)  -> similarities, sublane-resident (index j)
    #   out_ref     : VMEM (1, 1, 1)   -> sum_i R_pos[i] / R_ndcg[i]  (numerator only)
    pos_r = slab_ref[0, 0:1, :]               # (1, Np)
    ndcg_r = slab_ref[0, 1:2, :]              # (1, Np)  (constant row)
    neg_ndcg_r = slab_ref[0, 2:3, :]          # (1, Np)  (constant row)
    sim_r = slab_ref[0, 3:4, :]               # (1, Np)
    sim_c = sim_col_ref[0]                    # (Np, 1)

    # d_sig[j, i] = sigmoid((sim[j] - sim[i]) / temp), exponent clamped to [-50, 50].
    expo = jnp.clip((sim_c - sim_r) * (-1.0 / _TEMP), -50.0, 50.0)   # (Np, Np)
    d_sig = pl.reciprocal(1.0 + jnp.exp(expo), approx=True)          # (Np, Np)

    # Row sums (over j) with the diagonal (sigmoid(0) = 0.5) removed algebraically.
    s_all = jnp.sum(d_sig, axis=0, keepdims=True) - 0.5                     # (1, Np)
    s_pos = (jnp.dot(pos_r, d_sig, preferred_element_type=jnp.float32)
             - 0.5 * pos_r)                                                 # (1, Np)

    r_all = 1.0 + s_all
    r_pos = (1.0 + s_pos * ndcg_r) * pos_r
    r_neg = r_all - r_pos
    r_ndcg = r_neg * neg_ndcg_r + r_pos
    # For rows with pos==0 (incl. padded rows), r_pos==0 and the "+ (1-pos)" keeps
    # the denominator > 0, so they contribute exactly 0 with no NaN path.
    ratio = r_pos * pl.reciprocal(r_ndcg + (1.0 - pos_r), approx=True)
    out_ref[...] = jnp.sum(ratio, axis=1, keepdims=True).reshape(1, 1, 1)


def _erfa_pallas(slab, sim_col):
    b, _, np_ = slab.shape
    return pl.pallas_call(
        _erfa_kernel,
        out_shape=jax.ShapeDtypeStruct((b, 1, 1), jnp.float32),
        grid=(b,),
        in_specs=[
            pl.BlockSpec((1, 8, np_), lambda i: (i, 0, 0)),
            pl.BlockSpec((1, np_, 1), lambda i: (i, 0, 0)),
        ],
        out_specs=pl.BlockSpec((1, 1, 1), lambda i: (i, 0, 0)),
        compiler_params=pltpu.CompilerParams(
            dimension_semantics=("parallel",)),
    )(slab, sim_col)


# ----------------------------------------------------------------------------
# Plain-JAX glue: NDCG of a single relevance row (matches ERFA.ndcg for one row)
# ----------------------------------------------------------------------------
def _ndcg_row(golden, current, log2_table):
    def dcg(rel):
        return jnp.sum((jnp.exp2(rel) - 1.0) / log2_table)
    idcg = dcg(jnp.sort(golden)[::-1])          # descending sort
    dcg_v = dcg(current)
    safe = jnp.where(idcg == 0.0, 1.0, idcg)
    return jnp.where(idcg == 0.0, 0.0, dcg_v / safe)


# ----------------------------------------------------------------------------
# Batched forward (B independent ERFA samples in one kernel launch)
# ----------------------------------------------------------------------------
@jax.jit
def erfa_forward_batched(sim_all, pos_mask_, gt_iou):
    """sim_all: (B,N) f32 ; pos_mask_: (B,N+1) bool ; gt_iou: (B,N) f32 -> (B,) f32."""
    b, n = sim_all.shape
    sim_all = sim_all.astype(jnp.float32)
    gt_iou = gt_iou.astype(jnp.float32)
    log2_table = jnp.log2(jnp.arange(2, n + 2, dtype=jnp.float32))   # constant under jit

    pos_f = pos_mask_[:, 1:].astype(jnp.float32)                     # (B, N)
    neg_f = 1.0 - pos_f

    # TODO(synk): argsort + NDCG prep are data-dependent sorts; kept in plain JAX/XLA.
    sort_ind = jnp.argsort(-sim_all, axis=1)
    neg_sorted = jnp.take_along_axis(neg_f, sort_ind, axis=1)
    gt_sorted = jnp.take_along_axis(gt_iou, sort_ind, axis=1)

    ndcg_v = jax.vmap(lambda g: _ndcg_row(g, g, log2_table))(gt_sorted)       # (B,)
    neg_ndcg_v = jax.vmap(lambda g: _ndcg_row(g, g, log2_table))(neg_sorted)  # (B,)

    # Pad the retrieval axis to a lane-dense multiple of 128.  Padded sims are a
    # huge negative so their sigmoid contribution underflows to ~0 (after the
    # +-50 clip); padded positives are 0 so they never reach the output.
    np_ = ((n + 127) // 128) * 128
    pad = np_ - n
    sim_pad = jnp.pad(sim_all, ((0, 0), (0, pad)), constant_values=_PAD_NEG)
    pos_pad = jnp.pad(pos_f, ((0, 0), (0, pad)))

    # Pack the per-sample metadata into one tile-aligned (8, Np) slab.
    slab = jnp.concatenate(
        [
            pos_pad[:, None, :],                                              # row 0
            jnp.broadcast_to(ndcg_v[:, None, None], (b, 1, np_)),             # row 1
            jnp.broadcast_to(neg_ndcg_v[:, None, None], (b, 1, np_)),         # row 2
            sim_pad[:, None, :],                                              # row 3
            jnp.zeros((b, 4, np_), jnp.float32),                              # rows 4..7
        ],
        axis=1,
    ).astype(jnp.float32)

    num = _erfa_pallas(slab, sim_pad.reshape(b, np_, 1)).reshape(b)

    pos_total = jnp.sum(pos_f, axis=1)
    ap_ndcg = num / jnp.maximum(pos_total, 1.0)
    # `if torch.sum(pos_mask) == 0: return 0.0001`
    return jnp.where(pos_total == 0.0, jnp.float32(1e-4), ap_ndcg)


def erfa_forward(sim_all, pos_mask_, gt_iou):
    """Original ERFA.forward signature: sim_all (N,), pos_mask_ (1,N+1) bool, gt_iou (N,) -> (1,)."""
    return erfa_forward_batched(sim_all[None, :], pos_mask_, gt_iou[None, :])


# ----------------------------------------------------------------------------
# Pure-JAX reference (mirrors the torch code) for a sanity check
# ----------------------------------------------------------------------------
def erfa_reference(sim_all, pos_mask_, gt_iou):
    n = sim_all.shape[0]
    log2_table = jnp.log2(jnp.arange(2, n + 2, dtype=jnp.float32))

    def dcg(rel):
        return jnp.sum((jnp.exp2(rel) - 1.0) / log2_table)

    def ndcg(golden, current):
        idcg = dcg(jnp.sort(golden)[::-1])
        return jnp.where(idcg == 0.0, 0.0,
                         dcg(current) / jnp.where(idcg == 0.0, 1.0, idcg))

    pos_mask = pos_mask_[:, 1:]
    pos_f = pos_mask.astype(jnp.float32)
    neg_f = (~pos_mask).astype(jnp.float32)
    sort_ind = jnp.argsort(-sim_all)
    neg_sorted = neg_f[0][sort_ind]
    gt_sorted = gt_iou[sort_ind]
    ndcg_v = ndcg(gt_sorted, gt_sorted)
    neg_ndcg_v = ndcg(neg_sorted, neg_sorted)

    d = sim_all.reshape(1, n)
    d_rep = jnp.tile(d, (n, 1))
    D = d_rep - d_rep.T
    D = 1.0 / (1.0 + jnp.exp(jnp.clip(-D / 0.01, -50.0, 50.0)))
    D_ = D * (1.0 - jnp.eye(n, dtype=jnp.float32))
    D_pos = D_ * pos_f
    R = 1.0 + jnp.sum(D_, axis=1)
    R_pos = (1.0 + jnp.sum(D_pos, axis=1) * ndcg_v) * pos_f
    R_neg = R - R_pos
    R_ndcg = R_neg * neg_ndcg_v + R_pos
    ap = jnp.sum(R_pos / R_ndcg) / jnp.sum(pos_f)
    return jnp.where(jnp.sum(pos_f) == 0.0, jnp.float32(1e-4), ap).reshape(1)


if __name__ == "__main__":
    key = jax.random.PRNGKey(0)
    k1, k2, k3 = jax.random.split(key, 3)

    B, N = 8, 100          # N <= 100 (ndcg log2-table constraint in the torch code)
    sim_all = jax.random.normal(k1, (B, N), dtype=jnp.float32)
    pos_mask_ = jax.random.bernoulli(k2, 0.4, (B, N + 1))
    gt_iou = jax.random.uniform(k3, (B, N), dtype=jnp.float32)

    out = erfa_forward_batched(sim_all, pos_mask_, gt_iou)
    jax.block_until_ready(out)

    ref = jnp.stack([erfa_reference(sim_all[i], pos_mask_[i:i + 1], gt_iou[i])[0]
                     for i in range(B)])
    # approx=True EUP reciprocals carry a small approximation error, hence the
    # slightly relaxed tolerance vs the exact-divide reference.
    assert jnp.allclose(out, ref, rtol=5e-3, atol=5e-4), (out, ref)

    # Single-sample path with the original module's signature.
    single = erfa_forward(sim_all[0], pos_mask_[0:1], gt_iou[0])
    jax.block_until_ready(single)
    assert jnp.allclose(single, ref[0:1], rtol=5e-3, atol=5e-4), (single, ref[0])

    print("KERNEL_OK")
</pallas_src>

<mosaic_0001>
module attributes {stable_mosaic.version = 11 : i64} {
  func.func @_erfa_kernel(%arg0: i32, %arg1: memref<1x8x128xf32, #tpu.memory_space<vmem>>, %arg2: memref<1x128x1xf32, #tpu.memory_space<vmem>>, %arg3: memref<1x1x1xf32, #tpu.memory_space<vmem>>) attributes {dimension_semantics = [#tpu.dimension_semantics<parallel>], iteration_bounds = array<i64: 8>, scalar_prefetch = 0 : i64, scratch_operands = 0 : i64, tpu.core_type = #tpu.core_type<tc>, window_params = [{transform_indices = @transform_0, window_bounds = array<i64: 1, 8, 128>}, {transform_indices = @transform_1, window_bounds = array<i64: 1, 128, 1>}, {transform_indices = @transform_2, window_bounds = array<i64: 1, 1, 1>}]} {
    %c0 = arith.constant 0 : index
    %c0_0 = arith.constant 0 : index
    %c0_1 = arith.constant 0 : index
    %0 = vector.load %arg1[%c0, %c0_0, %c0_1] : memref<1x8x128xf32, #tpu.memory_space<vmem>>, vector<1x1x128xf32>
    %1 = vector.shape_cast %0 : vector<1x1x128xf32> to vector<1x128xf32>
    %c0_2 = arith.constant 0 : index
    %c1 = arith.constant 1 : index
    %c0_3 = arith.constant 0 : index
    %2 = vector.load %arg1[%c0_2, %c1, %c0_3] : memref<1x8x128xf32, #tpu.memory_space<vmem>>, vector<1x1x128xf32>
    %3 = vector.shape_cast %2 : vector<1x1x128xf32> to vector<1x128xf32>
    %c0_4 = arith.constant 0 : index
    %c2 = arith.constant 2 : index
    %c0_5 = arith.constant 0 : index
    %4 = vector.load %arg1[%c0_4, %c2, %c0_5] : memref<1x8x128xf32, #tpu.memory_space<vmem>>, vector<1x1x128xf32>
    %5 = vector.shape_cast %4 : vector<1x1x128xf32> to vector<1x128xf32>
    %c0_6 = arith.constant 0 : index
    %c3 = arith.constant 3 : index
    %c0_7 = arith.constant 0 : index
    %6 = vector.load %arg1[%c0_6, %c3, %c0_7] : memref<1x8x128xf32, #tpu.memory_space<vmem>>, vector<1x1x128xf32>
    %7 = vector.shape_cast %6 : vector<1x1x128xf32> to vector<1x128xf32>
    %c0_8 = arith.constant 0 : index
    %c0_9 = arith.constant 0 : index
    %c0_10 = arith.constant 0 : index
    %8 = vector.load %arg2[%c0_8, %c0_9, %c0_10] : memref<1x128x1xf32, #tpu.memory_space<vmem>>, vector<1x128x1xf32>
    %9 = vector.shape_cast %8 : vector<1x128x1xf32> to vector<128x1xf32>
    %10 = vector.broadcast %9 : vector<128x1xf32> to vector<128x128xf32>
    %11 = vector.broadcast %7 : vector<1x128xf32> to vector<128x128xf32>
    %12 = arith.subf %10, %11 : vector<128x128xf32>
    %cst = arith.constant -1.000000e+02 : f32
    %13 = vector.broadcast %cst : f32 to vector<128x128xf32>
    %14 = arith.mulf %12, %13 : vector<128x128xf32>
    %cst_11 = arith.constant -5.000000e+01 : f32
    %cst_12 = arith.constant 5.000000e+01 : f32
    %15 = vector.broadcast %cst_11 : f32 to vector<128x128xf32>
    %16 = arith.maximumf %15, %14 : vector<128x128xf32>
    %17 = vector.broadcast %cst_12 : f32 to vector<128x128xf32>
    %18 = arith.minimumf %17, %16 : vector<128x128xf32>
    %19 = math.exp %18 : vector<128x128xf32>
    %cst_13 = arith.constant 1.000000e+00 : f32
    %20 = vector.broadcast %cst_13 : f32 to vector<128x128xf32>
    %21 = arith.addf %20, %19 : vector<128x128xf32>
    %22 = tpu.reciprocal %21 {approx = true} : vector<128x128xf32> -> vector<128x128xf32>
    %cst_14 = arith.constant dense<0.000000e+00> : vector<128xf32>
    %23 = vector.multi_reduction <add>, %22, %cst_14 [0] : vector<128x128xf32> to vector<128xf32>
    %24 = vector.shape_cast %23 : vector<128xf32> to vector<1x128xf32>
    %cst_15 = arith.constant 5.000000e-01 : f32
    %25 = vector.broadcast %cst_15 : f32 to vector<1x128xf32>
    %26 = arith.subf %24, %25 : vector<1x128xf32>
    %cst_16 = arith.constant dense<0.000000e+00> : vector<1x128xf32>
    %27 = tpu.matmul %1, %22, %cst_16 {dimension_numbers = #tpu.dot_dimension_numbers<[1], [0], [0], [1], [0, 0, 1, 1], [], []>} : vector<1x128xf32>, vector<128x128xf32>, vector<1x128xf32> -> vector<1x128xf32>
    %cst_17 = arith.constant 5.000000e-01 : f32
    %28 = vector.broadcast %cst_17 : f32 to vector<1x128xf32>
    %29 = arith.mulf %28, %1 : vector<1x128xf32>
    %30 = arith.subf %27, %29 : vector<1x128xf32>
    %cst_18 = arith.constant 1.000000e+00 : f32
    %31 = vector.broadcast %cst_18 : f32 to vector<1x128xf32>
    %32 = arith.addf %31, %26 : vector<1x128xf32>
    %33 = arith.mulf %30, %3 : vector<1x128xf32>
    %cst_19 = arith.constant 1.000000e+00 : f32
    %34 = vector.broadcast %cst_19 : f32 to vector<1x128xf32>
    %35 = arith.addf %34, %33 : vector<1x128xf32>
    %36 = arith.mulf %35, %1 : vector<1x128xf32>
    %37 = arith.subf %32, %36 : vector<1x128xf32>
    %38 = arith.mulf %37, %5 : vector<1x128xf32>
    %39 = arith.addf %38, %36 : vector<1x128xf32>
    %cst_20 = arith.constant 1.000000e+00 : f32
    %40 = vector.broadcast %cst_20 : f32 to vector<1x128xf32>
    %41 = arith.subf %40, %1 : vector<1x128xf32>
    %42 = arith.addf %39, %41 : vector<1x128xf32>
    %43 = tpu.reciprocal %42 {approx = true} : vector<1x128xf32> -> vector<1x128xf32>
    %44 = arith.mulf %36, %43 : vector<1x128xf32>
    %cst_21 = arith.constant dense<0.000000e+00> : vector<1xf32>
    %45 = vector.multi_reduction <add>, %44, %cst_21 [1] : vector<1x128xf32> to vector<1xf32>
    %46 = vector.shape_cast %45 : vector<1xf32> to vector<1x1xf32>
    %47 = vector.shape_cast %46 : vector<1x1xf32> to vector<1x1x1xf32>
    %c0_22 = arith.constant 0 : index
    %c0_23 = arith.constant 0 : index
    %c0_24 = arith.constant 0 : index
    %48 = vector.load %arg3[%c0_22, %c0_23, %c0_24] : memref<1x1x1xf32, #tpu.memory_space<vmem>>, vector<1x1x1xf32>
    tpu.vector_store %arg3[%c0_22, %c0_23, %c0_24], %47 {strides = array<i32>} : memref<1x1x1xf32, #tpu.memory_space<vmem>>, vector<1x1x1xf32>,
    return
  }
  func.func @transform_0(%arg0: i32) -> (i32, i32, i32) {
    %c0_i32 = arith.constant 0 : i32
    %c0_i32_0 = arith.constant 0 : i32
    %c0_i32_1 = arith.constant 0 : i32
    return %arg0, %c0_i32, %c0_i32_0 : i32, i32, i32
  }
  func.func @transform_1(%arg0: i32) -> (i32, i32, i32) {
    %c0_i32 = arith.constant 0 : i32
    %c0_i32_0 = arith.constant 0 : i32
    %c0_i32_1 = arith.constant 0 : i32
    return %arg0, %c0_i32, %c0_i32_0 : i32, i32, i32
  }
  func.func @transform_2(%arg0: i32) -> (i32, i32, i32) {
    %c0_i32 = arith.constant 0 : i32
    %c0_i32_0 = arith.constant 0 : i32
    %c0_i32_1 = arith.constant 0 : i32
    return %arg0, %c0_i32, %c0_i32_0 : i32, i32, i32
  }
}

</mosaic_0001>

<llo_original>
// kernel: neg.1
$region0: #{neg.1}
  #allocation2 [shape = 's32[1]{0}', space=sflag, size = 0x4, scoped, tag = 'scoped memory for neg.1']
  %s0 = inlined_call_operand.hbm [shape: f32[8,100], index: 0, kind: input, shape index: {}]
  %s1 = inlined_call_operand.vmem [shape: f32[8,100], index: 1, kind: output, shape index: {}]
  $region1: #{neg.1} parent=0
    #allocation0 [shape = 'u8[4096]{0}', space=vmem, size = 0x1000, scoped, tag = 'operand span for operand 0']
    #allocation1 [shape = 's32[1]{0}', space=sflag, size = 0x4, scoped, tag = 'scoped memory for neg.1']
    %2 = vsyncpa [#allocation1], 0
    %s4 = ssub.s32 128, 128
    %5 = vsyncadd [#allocation1], %s4
    %s7 = sshll.u32 [#allocation0], 4
    %s8 = int_to_ptr.vmem [resolvable:$true] %s7
    %10 = dma.hbm_to_vmem [thread:$0]  %s0, 128, %s8, [#allocation1]
    %11 = dma.done [#allocation1], 128
    %v12 = vld [vmem:[#allocation0] sm:$0xff]
    %13 = xla_tuple %v12
    %14 = xla_tuple %13
    %v15 = vxor.u32 %v12, 2147483648
    %16 = xla_tuple %v15
    %17 = vst [vmem:[%s1] sm:$0xff] %v15
    %18 = vsyncpa [#allocation1], 1

// kernel: erfa_forward_batched.1
$region0: #{erfa_forward_batched.1}
  #allocation0 [shape = 'u32[]', space=smem, size = 0x4, offset = 0x4, fixed_abs, tag = 'smem constant byte address 0x4 - core index']
  #allocation1 [shape = 'u32[144,128]{1,0:T(1,128)}', space=vmem, size = 0x12000, scoped, tag = 'internal scratch']
  %s0 = inlined_call_operand.vmem [shape: f32[8,8,128], index: 0, kind: input, shape index: {}]
  %s1 = inlined_call_operand.vmem [shape: f32[8,128,1], index: 1, kind: input, shape index: {}]
  %s2 = inlined_call_operand.vmem [shape: f32[8,1,1], index: 2, kind: output, shape index: {}]
  %s3 = sld [smem:[#allocation0]]
  $region41: #{erfa_forward_batched.1} parent=0
    _
  %s5 = ssub.s32 1, %s3
  %s6 = scalar_select 0, %s5, %s3
  loop: start=0, step=1, limit=10
  $region2: #{erfa_forward_batched.1} parent=0 // loop_pre_header
    _
  $region3: #{erfa_forward_batched.1} parent=0 // loop_header
    %s8 = sphi 0, %s12
    %p9 = scmp.ge.s32.totalorder %s8, 10
    %s18 = sphi 0, %s20
    %s21 = sphi 0, %s18
    %s22 = sphi 0, %s21
    %s38 = sphi 0, %s22
    %s44 = sphi 0, %s46
    %s47 = sphi 0, %s44
    %s48 = sphi 0, %s47
    %s64 = sphi 0, %s48
    %s70 = sphi 0, %s72
    %s73 = sphi 0, %s70
    %s74 = sphi 0, %s73
    %s90 = sphi 0, %s74
  $region4: #{erfa_forward_batched.1} parent=0 // loop_header_branch
    %11 = sbr.rel (%p9) target = $region8
  $region5: #{erfa_forward_batched.1} parent=0 // loop_body
    %s13 = ssub.s32 %s8, 1
    %s14 = ssub.s32 %s8, 2
    %s15 = sadd.s32 %s8, 1
    %s16 = ssub.s32 %s8, %s15
    %p17 = scmp.eq.s32.totalorder %s16, 0
    %s19 = sadd.s32 %s18, 1
    %s20 = scalar_select %p17, %s18, %s19
    %p23 = pneg %p17
    %p24 = scmp.eq.s32.totalorder %s8, 7
    %p25 = por %p23, %p24
    %p26 = scmp.ne.s32.totalorder %s18, %s21
    %p27 = scmp.eq.s32.totalorder %s8, 0
    %p28 = por %p26, %p27
    %p29 = scmp.ne.s32.totalorder %s18, %s21
    %p30 = scmp.eq.s32.totalorder %s13, 7
    %p31 = por %p29, %p30
    %p32 = scmp.ne.s32.totalorder %s21, %s22
    %p33 = scmp.eq.s32.totalorder %s13, 0
    %p34 = por %p32, %p33
    %p35 = scmp.ne.s32.totalorder %s21, %s22
    %p36 = scmp.eq.s32.totalorder %s14, 7
    %p37 = por %p35, %p36
    %p39 = scmp.ne.s32.totalorder %s22, %s38
    %p40 = scmp.eq.s32.totalorder %s14, 0
    %p41 = por %p39, %p40
    %s42 = ssub.s32 %s8, %s15
    %p43 = scmp.eq.s32.totalorder %s42, 0
    %s45 = sadd.s32 %s44, 1
    %s46 = scalar_select %p43, %s44, %s45
    %p49 = pneg %p43
    %p50 = scmp.eq.s32.totalorder %s8, 7
    %p51 = por %p49, %p50
    %p52 = scmp.ne.s32.totalorder %s44, %s47
    %p53 = scmp.eq.s32.totalorder %s8, 0
    %p54 = por %p52, %p53
    %p55 = scmp.ne.s32.totalorder %s44, %s47
    %p56 = scmp.eq.s32.totalorder %s13, 7
    %p57 = por %p55, %p56
    %p58 = scmp.ne.s32.totalorder %s47, %s48
    %p59 = scmp.eq.s32.totalorder %s13, 0
    %p60 = por %p58, %p59
    %p61 = scmp.ne.s32.totalorder %s47, %s48
    %p62 = scmp.eq.s32.totalorder %s14, 7
    %p63 = por %p61, %p62
    %p65 = scmp.ne.s32.totalorder %s48, %s64
    %p66 = scmp.eq.s32.totalorder %s14, 0
    %p67 = por %p65, %p66
    %s68 = ssub.s32 %s8, %s15
    %p69 = scmp.eq.s32.totalorder %s68, 0
    %s71 = sadd.s32 %s70, 1
    %s72 = scalar_select %p69, %s70, %s71
    %p75 = pneg %p69
    %p76 = scmp.eq.s32.totalorder %s8, 7
    %p77 = por %p75, %p76
    %p78 = scmp.ne.s32.totalorder %s70, %s73
    %p79 = scmp.eq.s32.totalorder %s8, 0
    %p80 = por %p78, %p79
    %p81 = scmp.ne.s32.totalorder %s70, %s73
    %p82 = scmp.eq.s32.totalorder %s13, 7
    %p83 = por %p81, %p82
    %p84 = scmp.ne.s32.totalorder %s73, %s74
    %p85 = scmp.eq.s32.totalorder %s13, 0
    %p86 = por %p84, %p85
    %p87 = scmp.ne.s32.totalorder %s73, %s74
    %p88 = scmp.eq.s32.totalorder %s14, 7
    %p89 = por %p87, %p88
    %p91 = scmp.ne.s32.totalorder %s74, %s90
    %p92 = scmp.eq.s32.totalorder %s14, 0
    %p93 = por %p91, %p92
    %p94 = scmp.le.s32.totalorder 1, %s8
    %p95 = scmp.lt.s32.totalorder %s8, 9
    %p96 = pnand %p94, %p95
    %p97 = pneg %p96
    // Predicated region
    $region9: #{erfa_forward_batched.1} parent=5 // pred_check
      _
    $region10: #{erfa_forward_batched.1} parent=5 // pred_check_branch
      %99 = sbr.rel (%p96) target = $region12
    $region11: #{erfa_forward_batched.1} parent=5 // pred_region
      %s100 = ssub.s32 %s8, 1
    $region12: #{erfa_forward_batched.1} parent=5 // pred_fallthru
      _
    %p101 = scmp.lt.s32.totalorder %s8, 8
    // Predicated region
    $region13: #{erfa_forward_batched.1} parent=5 // pred_check
      %p102 = pneg %p101
    $region14: #{erfa_forward_batched.1} parent=5 // pred_check_branch
      %104 = sbr.rel (%p102) target = $region16
    $region15: #{erfa_forward_batched.1} parent=5 // pred_region
      // Predicated region
      $region17: #{erfa_forward_batched.1} parent=15 // pred_check
        %p105 = pneg %p28
      $region18: #{erfa_forward_batched.1} parent=15 // pred_check_branch
        %107 = sbr.rel (%p105) target = $region20
      $region19: #{erfa_forward_batched.1} parent=15 // pred_region
        %p108 = scmp.lt.s32.totalorder %s8, 7
        %s109 = scalar_select %p108, %s8, 7
        %s110 = smul.addr %s109, 8
        %s111 = scalar_lea.vmem %s0, %s110
      $region20: #{erfa_forward_batched.1} parent=15 // pred_fallthru
        _
      // Predicated region
      $region21: #{erfa_forward_batched.1} parent=15 // pred_check
        %p112 = pneg %p54
      $region22: #{erfa_forward_batched.1} parent=15 // pred_check_branch
        %114 = sbr.rel (%p112) target = $region24
      $region23: #{erfa_forward_batched.1} parent=15 // pred_region
        %p115 = scmp.lt.s32.totalorder %s8, 7
        %s116 = scalar_select %p115, %s8, 7
        %s117 = smul.addr %s116, 16
        %s118 = smul.addr %s117, 8
        %s119 = scalar_lea.vmem %s1, %s118
      $region24: #{erfa_forward_batched.1} parent=15 // pred_fallthru
        _
    $region16: #{erfa_forward_batched.1} parent=5 // pred_fallthru
      _
    %p120 = scmp.le.s32.totalorder 1, %s8
    %p121 = scmp.lt.s32.totalorder %s8, 9
    %p122 = pnand %p120, %p121
    %p123 = pneg %p122
    // Predicated region
    $region25: #{erfa_forward_batched.1} parent=5 // pred_check
      _
    $region26: #{erfa_forward_batched.1} parent=5 // pred_check_branch
      %125 = sbr.rel (%p122) target = $region28
    $region27: #{erfa_forward_batched.1} parent=5 // pred_region
      %s126 = ssub.s32 %s8, 1
      %p127 = scmp.lt.s32.totalorder %s13, 7
      %s128 = scalar_select %p127, %s13, 7
      %s129 = smul.addr %s128, 8
      %s130 = scalar_lea.vmem %s0, %s129
      %p131 = pneg %p34
      %p132 = pneg %p31
      %p133 = scmp.lt.s32.totalorder %s13, 7
      %s134 = scalar_select %p133, %s13, 7
      %s135 = smul.addr %s134, 16
      %s136 = smul.addr %s135, 8
      %s137 = scalar_lea.vmem %s1, %s136
      %p138 = pneg %p60
      %p139 = pneg %p57
      %p140 = pneg %p86
      %p141 = pneg %p83
      %p142 = scmp.lt.s32.totalorder %s13, 7
      %s143 = scalar_select %p142, %s13, 7
      %s144 = scalar_lea.vmem %s2, %s143
      %p145 = scmp.lt.s32.totalorder %s13, 7
      %s146 = scalar_select %p145, %s13, 7
      %s147 = smul.addr %s146, 8
      %s148 = scalar_lea.vmem %s0, %s147
      %p149 = scmp.lt.s32.totalorder %s13, 7
      %s150 = scalar_select %p149, %s13, 7
      %s151 = smul.addr %s150, 16
      %s152 = smul.addr %s151, 8
      %s153 = scalar_lea.vmem %s1, %s152
      %p154 = scmp.lt.s32.totalorder %s13, 7
      %s155 = scalar_select %p154, %s13, 7
      %s156 = scalar_lea.vmem %s2, %s155
      %v157 = vld [vmem:[%s148] sm:$0x1]
      %v158 = vld [vmem:[%s148 + $0x1] sm:$0x1]
      %v159 = vld [vmem:[%s148 + $0x2] sm:$0x1]
      %v160 = vld [vmem:[%s148 + $0x3] sm:$0x1]
      %v161 = vld [vmem:[%s153] sm:$0xff]
      %v162 = vld [vmem:[%s153 + $0x8] sm:$0xff]
      %v163 = vld [vmem:[%s153 + $0x10] sm:$0xff]
      %v164 = vld [vmem:[%s153 + $0x18] sm:$0xff]
      %v165 = vld [vmem:[%s153 + $0x20] sm:$0xff]
      %v166 = vld [vmem:[%s153 + $0x28] sm:$0xff]
      %v167 = vld [vmem:[%s153 + $0x30] sm:$0xff]
      %v168 = vld [vmem:[%s153 + $0x38] sm:$0xff]
      %v169 = vld [vmem:[%s153 + $0x40] sm:$0xff]
      %v170 = vld [vmem:[%s153 + $0x48] sm:$0xff]
      %v171 = vld [vmem:[%s153 + $0x50] sm:$0xff]
      %v172 = vld [vmem:[%s153 + $0x58] sm:$0xff]
      %v173 = vld [vmem:[%s153 + $0x60] sm:$0xff]
      %v174 = vld [vmem:[%s153 + $0x68] sm:$0xff]
      %v175 = vld [vmem:[%s153 + $0x70] sm:$0xff]
      %v176 = vld [vmem:[%s153 + $0x78] sm:$0xff]
      %178 = vset.pattern.permute.xlu0 0
      %179 = vperm.xlu0 %178, %v161
      %v180 = vpop.permute.xlu0 %179
      %183 = vset.pattern.permute.xlu0 0
      %184 = vperm.xlu0 %183, %v162
      %v185 = vpop.permute.xlu0 %184
      %188 = vset.pattern.permute.xlu0 0
      %189 = vperm.xlu0 %188, %v163
      %v190 = vpop.permute.xlu0 %189
      %193 = vset.pattern.permute.xlu0 0
      %194 = vperm.xlu0 %193, %v164
      %v195 = vpop.permute.xlu0 %194
      %198 = vset.pattern.permute.xlu0 0
      %199 = vperm.xlu0 %198, %v165
      %v200 = vpop.permute.xlu0 %199
      %203 = vset.pattern.permute.xlu0 0
      %204 = vperm.xlu0 %203, %v166
      %v205 = vpop.permute.xlu0 %204
      %208 = vset.pattern.permute.xlu0 0
      %209 = vperm.xlu0 %208, %v167
      %v210 = vpop.permute.xlu0 %209
      %213 = vset.pattern.permute.xlu0 0
      %214 = vperm.xlu0 %213, %v168
      %v215 = vpop.permute.xlu0 %214
      %218 = vset.pattern.permute.xlu0 0
      %219 = vperm.xlu0 %218, %v169
      %v220 = vpop.permute.xlu0 %219
      %223 = vset.pattern.permute.xlu0 0
      %224 = vperm.xlu0 %223, %v170
      %v225 = vpop.permute.xlu0 %224
      %228 = vset.pattern.permute.xlu0 0
      %229 = vperm.xlu0 %228, %v171
      %v230 = vpop.permute.xlu0 %229
      %233 = vset.pattern.permute.xlu0 0
      %234 = vperm.xlu0 %233, %v172
      %v235 = vpop.permute.xlu0 %234
      %238 = vset.pattern.permute.xlu0 0
      %239 = vperm.xlu0 %238, %v173
      %v240 = vpop.permute.xlu0 %239
      %243 = vset.pattern.permute.xlu0 0
      %244 = vperm.xlu0 %243, %v174
      %v245 = vpop.permute.xlu0 %244
      %248 = vset.pattern.permute.xlu0 0
      %249 = vperm.xlu0 %248, %v175
      %v250 = vpop.permute.xlu0 %249
      %253 = vset.pattern.permute.xlu0 0
      %254 = vperm.xlu0 %253, %v176
      %v255 = vpop.permute.xlu0 %254
      %v257 = vlaneseq
      %v258 = vshrl.u32 %v257, 7
      %v259 = vsub.s32 0, %v258
      %v260 = vrot.slane %v160, %v259
      %v261 = vsub.f32 %v180, %v260
      %v262 = vsub.f32 %v185, %v260
      %v263 = vsub.f32 %v190, %v260
      %v264 = vsub.f32 %v195, %v260
      %v265 = vsub.f32 %v200, %v260
      %v266 = vsub.f32 %v205, %v260
      %v267 = vsub.f32 %v210, %v260
      %v268 = vsub.f32 %v215, %v260
      %v269 = vsub.f32 %v220, %v260
      %v270 = vsub.f32 %v225, %v260
      %v271 = vsub.f32 %v230, %v260
      %v272 = vsub.f32 %v235, %v260
      %v273 = vsub.f32 %v240, %v260
      %v274 = vsub.f32 %v245, %v260
      %v275 = vsub.f32 %v250, %v260
      %v276 = vsub.f32 %v255, %v260
      %v277 = vmul.f32 %v261, -100.0
      %v278 = vmul.f32 %v262, -100.0
      %v279 = vmul.f32 %v263, -100.0
      %v280 = vmul.f32 %v264, -100.0
      %v281 = vmul.f32 %v265, -100.0
      %v282 = vmul.f32 %v266, -100.0
      %v283 = vmul.f32 %v267, -100.0
      %v284 = vmul.f32 %v268, -100.0
      %v285 = vmul.f32 %v269, -100.0
      %v286 = vmul.f32 %v270, -100.0
      %v287 = vmul.f32 %v271, -100.0
      %v288 = vmul.f32 %v272, -100.0
      %v289 = vmul.f32 %v273, -100.0
      %v290 = vmul.f32 %v274, -100.0
      %v291 = vmul.f32 %v275, -100.0
      %v292 = vmul.f32 %v276, -100.0
      %v293 = vmax.f32 %v277, -50.0
      %v294 = vmax.f32 %v278, -50.0
      %v295 = vmax.f32 %v279, -50.0
      %v296 = vmax.f32 %v280, -50.0
      %v297 = vmax.f32 %v281, -50.0
      %v298 = vmax.f32 %v282, -50.0
      %v299 = vmax.f32 %v283, -50.0
      %v300 = vmax.f32 %v284, -50.0
      %v301 = vmax.f32 %v285, -50.0
      %v302 = vmax.f32 %v286, -50.0
      %v303 = vmax.f32 %v287, -50.0
      %v304 = vmax.f32 %v288, -50.0
      %v305 = vmax.f32 %v289, -50.0
      %v306 = vmax.f32 %v290, -50.0
      %v307 = vmax.f32 %v291, -50.0
      %v308 = vmax.f32 %v292, -50.0
      %v309 = vmin.f32 %v293, 50.0
      %v310 = vmin.f32 %v294, 50.0
      %v311 = vmin.f32 %v295, 50.0
      %v312 = vmin.f32 %v296, 50.0
      %v313 = vmin.f32 %v297, 50.0
      %v314 = vmin.f32 %v298, 50.0
      %v315 = vmin.f32 %v299, 50.0
      %v316 = vmin.f32 %v300, 50.0
      %v317 = vmin.f32 %v301, 50.0
      %v318 = vmin.f32 %v302, 50.0
      %v319 = vmin.f32 %v303, 50.0
      %v320 = vmin.f32 %v304, 50.0
      %v321 = vmin.f32 %v305, 50.0
      %v322 = vmin.f32 %v306, 50.0
      %v323 = vmin.f32 %v307, 50.0
      %v324 = vmin.f32 %v308, 50.0
      %v325 = vmul.f32 %v309, 1.442695
      %v326 = vpow.pop %v325
      %v327 = vmul.f32 %v310, 1.442695
      %v328 = vpow.pop %v327
      %v329 = vmul.f32 %v311, 1.442695
      %v330 = vpow.pop %v329
      %v331 = vmul.f32 %v312, 1.442695
      %v332 = vpow.pop %v331
      %v333 = vmul.f32 %v313, 1.442695
      %v334 = vpow.pop %v333
      %v335 = vmul.f32 %v314, 1.442695
      %v336 = vpow.pop %v335
      %v337 = vmul.f32 %v315, 1.442695
      %v338 = vpow.pop %v337
      %v339 = vmul.f32 %v316, 1.442695
      %v340 = vpow.pop %v339
      %v341 = vmul.f32 %v317, 1.442695
      %v342 = vpow.pop %v341
      %v343 = vmul.f32 %v318, 1.442695
      %v344 = vpow.pop %v343
      %v345 = vmul.f32 %v319, 1.442695
      %v346 = vpow.pop %v345
      %v347 = vmul.f32 %v320, 1.442695
      %v348 = vpow.pop %v347
      %v349 = vmul.f32 %v321, 1.442695
      %v350 = vpow.pop %v349
      %v351 = vmul.f32 %v322, 1.442695
      %v352 = vpow.pop %v351
      %v353 = vmul.f32 %v323, 1.442695
      %v354 = vpow.pop %v353
      %v355 = vmul.f32 %v324, 1.442695
      %v356 = vpow.pop %v355
      %v357 = vadd.f32 %v326, 1.0
      %v358 = vadd.f32 %v328, 1.0
      %v359 = vadd.f32 %v330, 1.0
      %v360 = vadd.f32 %v332, 1.0
      %v361 = vadd.f32 %v334, 1.0
      %v362 = vadd.f32 %v336, 1.0
      %v363 = vadd.f32 %v338, 1.0
      %v364 = vadd.f32 %v340, 1.0
      %v365 = vadd.f32 %v342, 1.0
      %v366 = vadd.f32 %v344, 1.0
      %v367 = vadd.f32 %v346, 1.0
      %v368 = vadd.f32 %v348, 1.0
      %v369 = vadd.f32 %v350, 1.0
      %v370 = vadd.f32 %v352, 1.0
      %v371 = vadd.f32 %v354, 1.0
      %v372 = vadd.f32 %v356, 1.0
      %v373 = vrcp.pop %v357
      %v374 = vrcp.pop %v358
      %v375 = vrcp.pop %v359
      %v376 = vrcp.pop %v360
      %v377 = vrcp.pop %v361
      %v378 = vrcp.pop %v362
      %v379 = vrcp.pop %v363
      %v380 = vrcp.pop %v364
      %v381 = vrcp.pop %v365
      %v382 = vrcp.pop %v366
      %v383 = vrcp.pop %v367
      %v384 = vrcp.pop %v368
      %v385 = vrcp.pop %v369
      %v386 = vrcp.pop %v370
      %v387 = vrcp.pop %v371
      %v388 = vrcp.pop %v372
      %v389 = vadd.f32 %v373, %v374
      %v390 = vadd.f32 %v389, %v375
      %v391 = vadd.f32 %v390, %v376
      %v392 = vadd.f32 %v391, %v377
      %v393 = vadd.f32 %v392, %v378
      %v394 = vadd.f32 %v393, %v379
      %v395 = vadd.f32 %v394, %v380
      %v396 = vadd.f32 %v395, %v381
      %v397 = vadd.f32 %v396, %v382
      %v398 = vadd.f32 %v397, %v383
      %v399 = vadd.f32 %v398, %v384
      %v400 = vadd.f32 %v399, %v385
      %v401 = vadd.f32 %v400, %v386
      %v402 = vadd.f32 %v401, %v387
      %v403 = vadd.f32 %v402, %v388
      %v404 = vrot.slane %v403, 4
      %v405 = vadd.f32 %v403, %v404
      %v406 = vrot.slane %v405, 2
      %v407 = vadd.f32 %v405, %v406
      %v408 = vrot.slane %v407, 1
      %v409 = vadd.f32 %v407, %v408
      %v410 = vsub.f32 %v409, 0.5
      %411 = vmatprep.subr.mxu0 0.0
      %412 = vmatpush1.msra.mxu0 %v373
      %413 = vmatprep.subr.mxu0 0.0
      %414 = vmatpush1.msra.mxu0 %v374
      %415 = vmatprep.subr.mxu0 0.0
      %416 = vmatpush1.msra.mxu0 %v375
      %417 = vmatprep.subr.mxu0 0.0
      %418 = vmatpush1.msra.mxu0 %v376
      %419 = vmatprep.subr.mxu0 0.0
      %420 = vmatpush1.msra.mxu0 %v377
      %421 = vmatprep.subr.mxu0 0.0
      %422 = vmatpush1.msra.mxu0 %v378
      %423 = vmatprep.subr.mxu0 0.0
      %424 = vmatpush1.msra.mxu0 %v379
      %425 = vmatprep.subr.mxu0 0.0
      %426 = vmatpush1.msra.mxu0 %v380
      %427 = vmatprep.subr.mxu0 0.0
      %428 = vmatpush1.msra.mxu0 %v381
      %429 = vmatprep.subr.mxu0 0.0
      %430 = vmatpush1.msra.mxu0 %v382
      %431 = vmatprep.subr.mxu0 0.0
      %432 = vmatpush1.msra.mxu0 %v383
      %433 = vmatprep.subr.mxu0 0.0
      %434 = vmatpush1.msra.mxu0 %v384
      %435 = vmatprep.subr.mxu0 0.0
      %436 = vmatpush1.msra.mxu0 %v385
      %437 = vmatprep.subr.mxu0 0.0
      %438 = vmatpush1.msra.mxu0 %v386
      %439 = vmatprep.subr.mxu0 0.0
      %440 = vmatpush1.msra.mxu0 %v387
      %441 = vmatprep.subr.mxu0 0.0
      %442 = vmatpush1.msra.mxu0 %v388
      %443 = vmatprep.subr.mxu0 0.0
      %444 = vmatpush1.msra.mxu0 0.0
      %445 = vmatprep.subr.mxu0 0.0
      %446 = vmatpush1.msra.mxu0 0.0
      %447 = vmatprep.subr.mxu0 0.0
      %448 = vmatpush1.msra.mxu0 0.0
      %449 = vmatprep.subr.mxu0 0.0
      %450 = vmatpush1.msra.mxu0 0.0
      %451 = vmatprep.subr.mxu0 0.0
      %452 = vmatpush1.msra.mxu0 0.0
      %453 = vmatprep.subr.mxu0 0.0
      %454 = vmatpush1.msra.mxu0 0.0
      %455 = vmatprep.subr.mxu0 0.0
      %456 = vmatpush1.msra.mxu0 0.0
      %457 = vmatprep.subr.mxu0 0.0
      %458 = vmatpush1.msra.mxu0 0.0
      %459 = vmatprep.subr.mxu0 0.0
      %460 = vmatpush1.msra.mxu0 0.0
      %461 = vmatprep.subr.mxu0 0.0
      %462 = vmatpush1.msra.mxu0 0.0
      %463 = vmatprep.subr.mxu0 0.0
      %464 = vmatpush1.msra.mxu0 0.0
      %465 = vmatprep.subr.mxu0 0.0
      %466 = vmatpush1.msra.mxu0 0.0
      %467 = vmatprep.subr.mxu0 0.0
      %468 = vmatpush1.msra.mxu0 0.0
      %469 = vmatprep.subr.mxu0 0.0
      %470 = vmatpush1.msra.mxu0 0.0
      %471 = vmatprep.subr.mxu0 0.0
      %472 = vmatpush1.msra.mxu0 0.0
      %473 = vmatprep.subr.mxu0 0.0
      %474 = vmatpush1.msra.mxu0 0.0
      %475 = vmatprep.mubr.f32.mxu0 0.0
      %476 = vmatmul.mubr.f32.gmra.mrb[0].mxu0 %v157
      %v477 = vpop.f32.mrb[0].mxu0
      %v478 = vadd.f32 0.0, %v477
      %v479 = vpop.f32.mrb[0].mxu0
      %480 = vdwg.mxu0
      %v481 = vmul.f32 %v157, 0.5
      %v482 = vsub.f32 %v478, %v481
      %v483 = vadd.f32 %v410, 1.0
      %v484 = vmul.f32 %v482, %v158
      %v485 = vadd.f32 %v484, 1.0
      %v486 = vmul.f32 %v485, %v157
      %v487 = vsub.f32 %v483, %v486
      %v488 = vmul.f32 %v487, %v159
      %v489 = vadd.f32 %v488, %v486
      %v490 = vsub.f32 1.0, %v157
      %v491 = vadd.f32 %v489, %v490
      %v492 = vrcp.pop %v491
      %v493 = vmul.f32 %v486, %v492
      %vm494 = vcmask 1040384
      %v495 = vsel %vm494, %v493, 0.0
      %496 = vadd.xlane.f32.xlu0 %v495
      %v497 = vpop.xlane.xlu0 %496
      %vm498 = vcmask 0
      %499 = vst.msk [vmem:[%s156] sm:$0x1] %vm498, %v497
      %p500 = scmp.lt.s32.totalorder %s13, 7
      %s501 = scalar_select %p500, %s13, 7
      %s502 = scalar_lea.vmem %s2, %s501
      // Predicated region
      $region29: #{erfa_forward_batched.1} parent=27 // pred_check
        %p503 = pneg %p83
      $region30: #{erfa_forward_batched.1} parent=27 // pred_check_branch
        %505 = sbr.rel (%p503) target = $region32
      $region31: #{erfa_forward_batched.1} parent=27 // pred_region
        _
      $region32: #{erfa_forward_batched.1} parent=27 // pred_fallthru
        _
    $region28: #{erfa_forward_batched.1} parent=5 // pred_fallthru
      _
    %p506 = scmp.le.s32.totalorder 2, %s8
    // Predicated region
    $region33: #{erfa_forward_batched.1} parent=5 // pred_check
      %p507 = pneg %p506
    $region34: #{erfa_forward_batched.1} parent=5 // pred_check_branch
      %509 = sbr.rel (%p507) target = $region36
    $region35: #{erfa_forward_batched.1} parent=5 // pred_region
      %s510 = ssub.s32 %s8, 2
      // Predicated region
      $region37: #{erfa_forward_batched.1} parent=35 // pred_check
        %p511 = pneg %p89
      $region38: #{erfa_forward_batched.1} parent=35 // pred_check_branch
        %513 = sbr.rel (%p511) target = $region40
      $region39: #{erfa_forward_batched.1} parent=35 // pred_region
        %p514 = scmp.lt.s32.totalorder %s14, 7
        %s515 = scalar_select %p514, %s14, 7
        %s516 = scalar_lea.vmem %s2, %s515
      $region40: #{erfa_forward_batched.1} parent=35 // pred_fallthru
        _
    $region36: #{erfa_forward_batched.1} parent=5 // pred_fallthru
      _
  $region6: #{erfa_forward_batched.1} parent=0 // loop_footer
    %s12 = sadd.s32 1, %s8
  $region7: #{erfa_forward_batched.1} parent=0 // loop_footer_branch
    %7 = sbr.rel target = $region3
  $region8: #{erfa_forward_batched.1} parent=0 // loop_exit
    _

</llo_original>
